<compile_context>
chip_gen: v6e
topology: v6e:2x2x1
jax: 0.10.0
libtpu: 0.0.40
codegen_flags: <defaults>
</compile_context>

<pallas_src>
from functools import partial

import jax
import jax.numpy as jnp
from jax.experimental import pallas as pl
from jax.experimental.pallas import tpu as pltpu


# ----------------------------- config -----------------------------------
CONFIG = {
    "num_users": 32,
    "num_items": 48,
    "latent_dim_mlp": 8,
    "layers": [16, 32, 16, 8],   # layers[0] must equal 2 * latent_dim_mlp
    "weight_init_gaussian": True,
}

HID_PAD = 128  # pad every hidden width (and the combined one-hot) to 128


def _cdiv(a, b):
    return (a + b - 1) // b


def _round_up(x, m):
    return ((x + m - 1) // m) * m


def _pad2(a, rows, cols):
    r, c = a.shape
    return jnp.pad(a, ((0, rows - r), (0, cols - c)))


def _pad_col(b, rows):
    v = b.reshape(-1)
    return jnp.pad(v, (0, rows - v.shape[0]))


# ----------------------------- kernel ------------------------------------
def mlp_kernel(uidx_ref, iidx_ref, ew1_ref, wstack_ref, bstack_ref, out_ref,
               *, num_users):
    """One batch tile, batch along lanes.

    uidx_ref / iidx_ref : (1, 1, T) int32
    ew1_ref             : (128, 128) bf16   -- (emb @ W1)^T, embeddings folded in
    wstack_ref          : (3, 128, 128) bf16 -- [W2^T, W3^T, Wo^T (row 0 real)]
    bstack_ref          : (128, 4) f32      -- columns [b1, b2, b3, bo]
    out_ref             : (1, 1, T) f32     -- sigmoid(logit) for this tile
    """
    T = uidx_ref.shape[-1]
    u_idx = uidx_ref[0]                       # (1, T) int32
    i_idx = iidx_ref[0]                       # (1, T) int32

    # Combined one-hot, transposed: row r hits for r == user or r == users+item.
    row = jax.lax.broadcasted_iota(jnp.int32, (HID_PAD, T), 0)
    oh = jnp.logical_or(row == u_idx, row == (i_idx + num_users))
    oh = oh.astype(jnp.bfloat16)              # (128, T), batch on lanes

    # Layer 1 (embedding gather + concat + Linear fused into one matmul).
    h = jnp.dot(ew1_ref[...], oh, preferred_element_type=jnp.float32)
    h = jnp.maximum(h + bstack_ref[:, 0:1], 0.0)

    # Layer 2.
    h = jnp.dot(wstack_ref[0], h.astype(jnp.bfloat16),
                preferred_element_type=jnp.float32)
    h = jnp.maximum(h + bstack_ref[:, 1:2], 0.0)

    # Layer 3.
    h = jnp.dot(wstack_ref[1], h.astype(jnp.bfloat16),
                preferred_element_type=jnp.float32)
    h = jnp.maximum(h + bstack_ref[:, 2:3], 0.0)

    # Affine output: only row 0 of Wo^T is nonzero -> keep only the logit row,
    # so sigmoid (EUP) and the HBM store touch a single (1, T) row.
    z = jnp.dot(wstack_ref[2], h.astype(jnp.bfloat16),
                preferred_element_type=jnp.float32)
    logit = z[0:1, :] + bstack_ref[0:1, 3:4]
    out_ref[...] = jax.nn.sigmoid(logit).reshape(out_ref.shape)


# ----------------------------- one-time param prep -------------------------
def prepare_params(params, config):
    """Fold embeddings into layer 1, transpose/pad/stack weights, cast to bf16.

    Done once per parameter set; keep the result cached across forward calls.
    """
    latent = config["latent_dim_mlp"]
    nu, ni = int(config["num_users"]), int(config["num_items"])
    H = HID_PAD
    assert nu + ni <= H, "combined one-hot must fit in 128 rows"

    w1 = params["w1"]                                    # (2*latent, L1), (in, out)
    ew = jnp.concatenate(
        [params["emb_user"] @ w1[:latent, :],            # (nu, L1)
         params["emb_item"] @ w1[latent:, :]],           # (ni, L1)
        axis=0)                                          # (nu+ni, L1)
    ew1t = _pad2(ew.T, H, H).astype(jnp.bfloat16)        # (128, 128)

    wstack = jnp.stack([
        _pad2(params["w2"].T, H, H),                     # (L2, L1) -> 128x128
        _pad2(params["w3"].T, H, H),                     # (L3, L2) -> 128x128
        _pad2(params["wo"].T, H, H),                     # (1,  L3) -> row 0 real
    ]).astype(jnp.bfloat16)                              # (3, 128, 128)

    bstack = jnp.stack([
        _pad_col(params["b1"], H),
        _pad_col(params["b2"], H),
        _pad_col(params["b3"], H),
        _pad_col(params["bo"], H),
    ], axis=1).astype(jnp.float32)                       # (128, 4)

    return {"ew1t": ew1t, "wstack": wstack, "bstack": bstack,
            "num_users": nu, "num_items": ni}


# ----------------------------- wrapper ------------------------------------
def _pick_batch_tile(B, max_tile=1024):
    if B <= 8:
        return 8
    n_tiles = max(2, _cdiv(B, max_tile))    # >=2 grid steps -> v7x uses both TCs
    tile = _cdiv(B, n_tiles)
    align = 128 if tile >= 128 else 8       # lane-dense tiles once B is big enough
    return min(max_tile, _round_up(tile, align))


def mlp_forward(prepared, user_indices, item_indices, *, max_batch_tile=1024):
    """Reproduces MLP.forward(user_indices, item_indices); returns (B, 1) ratings."""
    B = int(user_indices.shape[0])
    nu, ni = prepared["num_users"], prepared["num_items"]

    batch_tile = _pick_batch_tile(B, max_batch_tile)
    num_tiles = _cdiv(B, batch_tile)
    B_pad = num_tiles * batch_tile

    # Clip (matches jnp.take / guards the one-hot), pad, lay out lane-major.
    u = jnp.clip(user_indices.astype(jnp.int32), 0, nu - 1)
    it = jnp.clip(item_indices.astype(jnp.int32), 0, ni - 1)
    u = jnp.pad(u, (0, B_pad - B)).reshape(num_tiles, 1, batch_tile)
    it = jnp.pad(it, (0, B_pad - B)).reshape(num_tiles, 1, batch_tile)

    ew, ws, bs = prepared["ew1t"], prepared["wstack"], prepared["bstack"]

    idx_spec = pl.BlockSpec((1, 1, batch_tile), lambda i: (i, 0, 0))
    out = pl.pallas_call(
        partial(mlp_kernel, num_users=nu),
        out_shape=jax.ShapeDtypeStruct((num_tiles, 1, batch_tile), jnp.float32),
        grid_spec=pltpu.PrefetchScalarGridSpec(
            num_scalar_prefetch=0,
            grid=(num_tiles,),
            in_specs=[
                idx_spec, idx_spec,
                pl.BlockSpec(ew.shape, lambda i: (0, 0)),
                pl.BlockSpec(ws.shape, lambda i: (0, 0, 0)),
                pl.BlockSpec(bs.shape, lambda i: (0, 0)),
            ],
            out_specs=pl.BlockSpec((1, 1, batch_tile), lambda i: (i, 0, 0)),
        ),
        compiler_params=pltpu.CompilerParams(
            dimension_semantics=("parallel",)),
    )(u, it, ew, ws, bs)

    return out.reshape(-1)[:B].reshape(B, 1)   # (B, 1) rating in (0, 1)


# ----------------------------- param init ---------------------------------
def init_params(config, key):
    """Init mirroring torch.nn.init.normal_(weight, 0.0, 0.01).

    Linear weights are stored as (in, out) = transpose of PyTorch's (out, in);
    biases are stored as (1, out) with small random values so the bias path is
    exercised by the check.
    """
    ks = jax.random.split(key, 10)
    std = 0.01
    L = config["layers"]
    latent = config["latent_dim_mlp"]
    return {
        "emb_user": std * jax.random.normal(ks[0], (config["num_users"], latent), jnp.float32),
        "emb_item": std * jax.random.normal(ks[1], (config["num_items"], latent), jnp.float32),
        "w1": std * jax.random.normal(ks[2], (L[0], L[1]), jnp.float32),
        "b1": std * jax.random.normal(ks[3], (1, L[1]), jnp.float32),
        "w2": std * jax.random.normal(ks[4], (L[1], L[2]), jnp.float32),
        "b2": std * jax.random.normal(ks[5], (1, L[2]), jnp.float32),
        "w3": std * jax.random.normal(ks[6], (L[2], L[3]), jnp.float32),
        "b3": std * jax.random.normal(ks[7], (1, L[3]), jnp.float32),
        "wo": std * jax.random.normal(ks[8], (L[3], 1), jnp.float32),
        "bo": std * jax.random.normal(ks[9], (1, 1), jnp.float32),
    }


# ----------------------------- reference ----------------------------------
def mlp_forward_ref(params, user_indices, item_indices):
    ue = jnp.take(params["emb_user"], user_indices, axis=0)
    ie = jnp.take(params["emb_item"], item_indices, axis=0)
    x = jnp.concatenate([ue, ie], axis=-1)
    for w, b in ((params["w1"], params["b1"]),
                 (params["w2"], params["b2"]),
                 (params["w3"], params["b3"])):
        x = jnp.maximum(x @ w + b, 0.0)
    logits = x @ params["wo"] + params["bo"]
    return jax.nn.sigmoid(logits)


# ----------------------------- main ----------------------------------------
if __name__ == "__main__":
    key = jax.random.PRNGKey(0)
    pkey, ukey, ikey = jax.random.split(key, 3)

    params = init_params(CONFIG, pkey)
    prepared = prepare_params(params, CONFIG)   # one-time (cache across calls)

    B = 16  # batch
    user_indices = jax.random.randint(ukey, (B,), 0, CONFIG["num_users"], dtype=jnp.int32)
    item_indices = jax.random.randint(ikey, (B,), 0, CONFIG["num_items"], dtype=jnp.int32)

    rating = mlp_forward(prepared, user_indices, item_indices)
    rating = jax.block_until_ready(rating)

    ref = mlp_forward_ref(params, user_indices, item_indices)
    assert rating.shape == (B, 1)
    # bf16 MXU operands with f32 accumulation -> relaxed tolerance vs f32 reference.
    assert jnp.allclose(rating, ref, atol=2e-3, rtol=1e-3), "mismatch vs JAX reference"

    print("KERNEL_OK")
</pallas_src>

<mosaic_0001>
module attributes {stable_mosaic.version = 11 : i64} {
  func.func @mlp_kernel(%arg0: i32, %arg1: memref<1x1x8xi32, #tpu.memory_space<vmem>>, %arg2: memref<1x1x8xi32, #tpu.memory_space<vmem>>, %arg3: memref<128x128xbf16, #tpu.memory_space<vmem>>, %arg4: memref<3x128x128xbf16, #tpu.memory_space<vmem>>, %arg5: memref<128x4xf32, #tpu.memory_space<vmem>>, %arg6: memref<1x1x8xf32, #tpu.memory_space<vmem>>) attributes {dimension_semantics = [#tpu.dimension_semantics<parallel>], iteration_bounds = array<i64: 2>, scalar_prefetch = 0 : i64, scratch_operands = 0 : i64, tpu.core_type = #tpu.core_type<tc>, window_params = [{transform_indices = @transform_0, window_bounds = array<i64: 1, 1, 8>}, {transform_indices = @transform_1, window_bounds = array<i64: 1, 1, 8>}, {pipeline_mode = #tpu.pipeline_mode<synchronous>, transform_indices = @transform_2, window_bounds = array<i64: 128, 128>}, {pipeline_mode = #tpu.pipeline_mode<synchronous>, transform_indices = @transform_3, window_bounds = array<i64: 3, 128, 128>}, {pipeline_mode = #tpu.pipeline_mode<synchronous>, transform_indices = @transform_4, window_bounds = array<i64: 128, 4>}, {transform_indices = @transform_5, window_bounds = array<i64: 1, 1, 8>}]} {
    %c0 = arith.constant 0 : index
    %c0_0 = arith.constant 0 : index
    %c0_1 = arith.constant 0 : index
    %0 = vector.load %arg1[%c0, %c0_0, %c0_1] : memref<1x1x8xi32, #tpu.memory_space<vmem>>, vector<1x1x8xi32>
    %1 = vector.shape_cast %0 : vector<1x1x8xi32> to vector<1x8xi32>
    %c0_2 = arith.constant 0 : index
    %c0_3 = arith.constant 0 : index
    %c0_4 = arith.constant 0 : index
    %2 = vector.load %arg2[%c0_2, %c0_3, %c0_4] : memref<1x1x8xi32, #tpu.memory_space<vmem>>, vector<1x1x8xi32>
    %3 = vector.shape_cast %2 : vector<1x1x8xi32> to vector<1x8xi32>
    %4 = tpu.iota {dimensions = array<i32: 0>} : vector<128x8xi32>
    %5 = vector.broadcast %1 : vector<1x8xi32> to vector<128x8xi32>
    %6 = arith.cmpi eq, %4, %5 : vector<128x8xi32>
    %c32_i32 = arith.constant 32 : i32
    %7 = vector.broadcast %c32_i32 : i32 to vector<1x8xi32>
    %8 = arith.addi %3, %7 : vector<1x8xi32>
    %9 = vector.broadcast %8 : vector<1x8xi32> to vector<128x8xi32>
    %10 = arith.cmpi eq, %4, %9 : vector<128x8xi32>
    %11 = arith.ori %6, %10 : vector<128x8xi1>
    %12 = arith.extui %11 : vector<128x8xi1> to vector<128x8xi32>
    %13 = arith.sitofp %12 : vector<128x8xi32> to vector<128x8xf32>
    %14 = arith.truncf %13 : vector<128x8xf32> to vector<128x8xbf16>
    %c0_5 = arith.constant 0 : index
    %c0_6 = arith.constant 0 : index
    %15 = vector.load %arg3[%c0_5, %c0_6] : memref<128x128xbf16, #tpu.memory_space<vmem>>, vector<128x128xbf16>
    %cst = arith.constant dense<0.000000e+00> : vector<128x8xf32>
    %16 = tpu.matmul %15, %14, %cst {dimension_numbers = #tpu.dot_dimension_numbers<[1], [0], [0], [1], [0, 0, 1, 1], [], []>} : vector<128x128xbf16>, vector<128x8xbf16>, vector<128x8xf32> -> vector<128x8xf32>
    %c0_7 = arith.constant 0 : index
    %c0_8 = arith.constant 0 : index
    %17 = vector.load %arg5[%c0_7, %c0_8] : memref<128x4xf32, #tpu.memory_space<vmem>>, vector<128x1xf32>
    %18 = vector.broadcast %17 : vector<128x1xf32> to vector<128x8xf32>
    %19 = arith.addf %16, %18 : vector<128x8xf32>
    %cst_9 = arith.constant 0.000000e+00 : f32
    %20 = vector.broadcast %cst_9 : f32 to vector<128x8xf32>
    %21 = arith.maximumf %19, %20 : vector<128x8xf32>
    %c0_10 = arith.constant 0 : index
    %c0_11 = arith.constant 0 : index
    %c0_12 = arith.constant 0 : index
    %22 = vector.load %arg4[%c0_10, %c0_11, %c0_12] : memref<3x128x128xbf16, #tpu.memory_space<vmem>>, vector<1x128x128xbf16>
    %23 = vector.shape_cast %22 : vector<1x128x128xbf16> to vector<128x128xbf16>
    %24 = arith.truncf %21 : vector<128x8xf32> to vector<128x8xbf16>
    %cst_13 = arith.constant dense<0.000000e+00> : vector<128x8xf32>
    %25 = tpu.matmul %23, %24, %cst_13 {dimension_numbers = #tpu.dot_dimension_numbers<[1], [0], [0], [1], [0, 0, 1, 1], [], []>} : vector<128x128xbf16>, vector<128x8xbf16>, vector<128x8xf32> -> vector<128x8xf32>
    %c0_14 = arith.constant 0 : index
    %c1 = arith.constant 1 : index
    %26 = vector.load %arg5[%c0_14, %c1] : memref<128x4xf32, #tpu.memory_space<vmem>>, vector<128x1xf32>
    %27 = vector.broadcast %26 : vector<128x1xf32> to vector<128x8xf32>
    %28 = arith.addf %25, %27 : vector<128x8xf32>
    %cst_15 = arith.constant 0.000000e+00 : f32
    %29 = vector.broadcast %cst_15 : f32 to vector<128x8xf32>
    %30 = arith.maximumf %28, %29 : vector<128x8xf32>
    %c1_16 = arith.constant 1 : index
    %c0_17 = arith.constant 0 : index
    %c0_18 = arith.constant 0 : index
    %31 = vector.load %arg4[%c1_16, %c0_17, %c0_18] : memref<3x128x128xbf16, #tpu.memory_space<vmem>>, vector<1x128x128xbf16>
    %32 = vector.shape_cast %31 : vector<1x128x128xbf16> to vector<128x128xbf16>
    %33 = arith.truncf %30 : vector<128x8xf32> to vector<128x8xbf16>
    %cst_19 = arith.constant dense<0.000000e+00> : vector<128x8xf32>
    %34 = tpu.matmul %32, %33, %cst_19 {dimension_numbers = #tpu.dot_dimension_numbers<[1], [0], [0], [1], [0, 0, 1, 1], [], []>} : vector<128x128xbf16>, vector<128x8xbf16>, vector<128x8xf32> -> vector<128x8xf32>
    %c0_20 = arith.constant 0 : index
    %c2 = arith.constant 2 : index
    %35 = vector.load %arg5[%c0_20, %c2] : memref<128x4xf32, #tpu.memory_space<vmem>>, vector<128x1xf32>
    %36 = vector.broadcast %35 : vector<128x1xf32> to vector<128x8xf32>
    %37 = arith.addf %34, %36 : vector<128x8xf32>
    %cst_21 = arith.constant 0.000000e+00 : f32
    %38 = vector.broadcast %cst_21 : f32 to vector<128x8xf32>
    %39 = arith.maximumf %37, %38 : vector<128x8xf32>
    %c2_22 = arith.constant 2 : index
    %c0_23 = arith.constant 0 : index
    %c0_24 = arith.constant 0 : index
    %40 = vector.load %arg4[%c2_22, %c0_23, %c0_24] : memref<3x128x128xbf16, #tpu.memory_space<vmem>>, vector<1x128x128xbf16>
    %41 = vector.shape_cast %40 : vector<1x128x128xbf16> to vector<128x128xbf16>
    %42 = arith.truncf %39 : vector<128x8xf32> to vector<128x8xbf16>
    %cst_25 = arith.constant dense<0.000000e+00> : vector<128x8xf32>
    %43 = tpu.matmul %41, %42, %cst_25 {dimension_numbers = #tpu.dot_dimension_numbers<[1], [0], [0], [1], [0, 0, 1, 1], [], []>} : vector<128x128xbf16>, vector<128x8xbf16>, vector<128x8xf32> -> vector<128x8xf32>
    %44 = vector.extract_strided_slice %43 {offsets = [0, 0], sizes = [1, 8], strides = [1, 1]} : vector<128x8xf32> to vector<1x8xf32>
    %c0_26 = arith.constant 0 : index
    %c3 = arith.constant 3 : index
    %45 = vector.load %arg5[%c0_26, %c3] : memref<128x4xf32, #tpu.memory_space<vmem>>, vector<1x1xf32>
    %46 = vector.broadcast %45 : vector<1x1xf32> to vector<1x8xf32>
    %47 = arith.addf %44, %46 : vector<1x8xf32>
    %48 = arith.negf %47 : vector<1x8xf32>
    %49 = math.exp %48 : vector<1x8xf32>
    %cst_27 = arith.constant 1.000000e+00 : f32
    %50 = vector.broadcast %cst_27 : f32 to vector<1x8xf32>
    %51 = arith.addf %50, %49 : vector<1x8xf32>
    %52 = arith.divf %50, %51 : vector<1x8xf32>
    %53 = vector.shape_cast %52 : vector<1x8xf32> to vector<1x1x8xf32>
    %c0_28 = arith.constant 0 : index
    %c0_29 = arith.constant 0 : index
    %c0_30 = arith.constant 0 : index
    %54 = vector.load %arg6[%c0_28, %c0_29, %c0_30] : memref<1x1x8xf32, #tpu.memory_space<vmem>>, vector<1x1x8xf32>
    tpu.vector_store %arg6[%c0_28, %c0_29, %c0_30], %53 {strides = array<i32>} : memref<1x1x8xf32, #tpu.memory_space<vmem>>, vector<1x1x8xf32>,
    return
  }
  func.func @transform_0(%arg0: i32) -> (i32, i32, i32) {
    %c0_i32 = arith.constant 0 : i32
    %c0_i32_0 = arith.constant 0 : i32
    %c0_i32_1 = arith.constant 0 : i32
    return %arg0, %c0_i32, %c0_i32_0 : i32, i32, i32
  }
  func.func @transform_1(%arg0: i32) -> (i32, i32, i32) {
    %c0_i32 = arith.constant 0 : i32
    %c0_i32_0 = arith.constant 0 : i32
    %c0_i32_1 = arith.constant 0 : i32
    return %arg0, %c0_i32, %c0_i32_0 : i32, i32, i32
  }
  func.func @transform_2(%arg0: i32) -> (i32, i32) {
    %c0_i32 = arith.constant 0 : i32
    %c0_i32_0 = arith.constant 0 : i32
    %c0_i32_1 = arith.constant 0 : i32
    return %c0_i32, %c0_i32_0 : i32, i32
  }
  func.func @transform_3(%arg0: i32) -> (i32, i32, i32) {
    %c0_i32 = arith.constant 0 : i32
    %c0_i32_0 = arith.constant 0 : i32
    %c0_i32_1 = arith.constant 0 : i32
    %c0_i32_2 = arith.constant 0 : i32
    return %c0_i32, %c0_i32_0, %c0_i32_1 : i32, i32, i32
  }
  func.func @transform_4(%arg0: i32) -> (i32, i32) {
    %c0_i32 = arith.constant 0 : i32
    %c0_i32_0 = arith.constant 0 : i32
    %c0_i32_1 = arith.constant 0 : i32
    return %c0_i32, %c0_i32_0 : i32, i32
  }
  func.func @transform_5(%arg0: i32) -> (i32, i32, i32) {
    %c0_i32 = arith.constant 0 : i32
    %c0_i32_0 = arith.constant 0 : i32
    %c0_i32_1 = arith.constant 0 : i32
    return %arg0, %c0_i32, %c0_i32_0 : i32, i32, i32
  }
}

</mosaic_0001>

<llo_original>
// kernel: tpu_custom_call.1
$region0: #{tpu_custom_call.1}
  #allocation0 [shape = 'u32[]', space=smem, size = 0x4, offset = 0x4, fixed_abs, tag = 'smem constant byte address 0x4 - core index']
  #allocation1 [shape = 'u32[144,128]{1,0:T(1,128)}', space=vmem, size = 0x12000, scoped, tag = 'internal scratch']
  %s0 = inlined_call_operand.vmem [shape: s32[2,1,8], index: 0, kind: input, shape index: {}]
  %s1 = inlined_call_operand.vmem [shape: s32[2,1,8], index: 1, kind: input, shape index: {}]
  %s2 = inlined_call_operand.vmem [shape: bf16[128,128], index: 2, kind: input, shape index: {}]
  %s3 = inlined_call_operand.hbm [shape: bf16[3,128,128], index: 3, kind: input, shape index: {}]
  %s4 = inlined_call_operand.vmem [shape: f32[128,4], index: 4, kind: input, shape index: {}]
  %s5 = inlined_call_operand.hbm [shape: f32[2,1,8], index: 5, kind: output, shape index: {}]
  %s6 = sld [smem:[#allocation0]]
  $region57: #{tpu_custom_call.1} parent=0
    _
  %s8 = ssub.s32 1, %s6
  %s9 = scalar_select 0, %s8, %s6
  $region1: #{tpu_custom_call.1} parent=0
    #allocation2 [shape = 'u8[98304]{0}', space=vmem, size = 0x18000, scoped, tag = 'input window, operand 3, single buffered']
    #allocation3 [shape = 's32[2]{0}', space=sflag, size = 0x8, scoped, tag = 'scoped memory for tpu_custom_call.1']
    #allocation4 [shape = 's32[2]{0}', space=sflag, size = 0x8, scoped, tag = 'scoped memory for tpu_custom_call.1']
    #allocation5 [shape = 'u8[1024]{0}', space=vmem, size = 0x400, scoped, tag = 'output window, operand 0']
    %10 = vsyncpa [#allocation3], 0
    %11 = vsyncpa [#allocation4], 0
    %s12 = scalar_lea.sflag [#allocation4], 1
    %13 = vsyncpa %s12, 0
    loop: start=0, step=1, limit=4
    $region2: #{tpu_custom_call.1} parent=1 // loop_pre_header
      _
    $region3: #{tpu_custom_call.1} parent=1 // loop_header
      %s15 = sphi 0, %s19
      %p16 = scmp.ge.s32.totalorder %s15, 4
      %s25 = sphi 0, %s27
      %s28 = sphi 0, %s25
      %s29 = sphi 0, %s28
      %s45 = sphi 0, %s29
      %s51 = sphi 0, %s53
      %s54 = sphi 0, %s51
      %s55 = sphi 0, %s54
      %s71 = sphi 0, %s55
      %s75 = sphi 0, %s75
      %s77 = sphi 0, %s75
      %s78 = sphi 0, %s77
      %s92 = sphi 0, %s78
      %s96 = sphi 0, %s96
      %s98 = sphi 0, %s96
      %s99 = sphi 0, %s98
      %s113 = sphi 0, %s99
      %s117 = sphi 0, %s117
      %s119 = sphi 0, %s117
      %s120 = sphi 0, %s119
      %s134 = sphi 0, %s120
      %s140 = sphi 0, %s142
      %s143 = sphi 0, %s140
      %s144 = sphi 0, %s143
      %s160 = sphi 0, %s144
    $region4: #{tpu_custom_call.1} parent=1 // loop_header_branch
      %18 = sbr.rel (%p16) target = $region8
    $region5: #{tpu_custom_call.1} parent=1 // loop_body
      %s20 = ssub.s32 %s15, 1
      %s21 = ssub.s32 %s15, 2
      %s22 = sadd.s32 %s15, 1
      %s23 = ssub.s32 %s15, %s22
      %p24 = scmp.eq.s32.totalorder %s23, 0
      %s26 = sadd.s32 %s25, 1
      %s27 = scalar_select %p24, %s25, %s26
      %p30 = pneg %p24
      %p31 = scmp.eq.s32.totalorder %s15, 1
      %p32 = por %p30, %p31
      %p33 = scmp.ne.s32.totalorder %s25, %s28
      %p34 = scmp.eq.s32.totalorder %s15, 0
      %p35 = por %p33, %p34
      %p36 = scmp.ne.s32.totalorder %s25, %s28
      %p37 = scmp.eq.s32.totalorder %s20, 1
      %p38 = por %p36, %p37
      %p39 = scmp.ne.s32.totalorder %s28, %s29
      %p40 = scmp.eq.s32.totalorder %s20, 0
      %p41 = por %p39, %p40
      %p42 = scmp.ne.s32.totalorder %s28, %s29
      %p43 = scmp.eq.s32.totalorder %s21, 1
      %p44 = por %p42, %p43
      %p46 = scmp.ne.s32.totalorder %s29, %s45
      %p47 = scmp.eq.s32.totalorder %s21, 0
      %p48 = por %p46, %p47
      %s49 = ssub.s32 %s15, %s22
      %p50 = scmp.eq.s32.totalorder %s49, 0
      %s52 = sadd.s32 %s51, 1
      %s53 = scalar_select %p50, %s51, %s52
      %p56 = pneg %p50
      %p57 = scmp.eq.s32.totalorder %s15, 1
      %p58 = por %p56, %p57
      %p59 = scmp.ne.s32.totalorder %s51, %s54
      %p60 = scmp.eq.s32.totalorder %s15, 0
      %p61 = por %p59, %p60
      %p62 = scmp.ne.s32.totalorder %s51, %s54
      %p63 = scmp.eq.s32.totalorder %s20, 1
      %p64 = por %p62, %p63
      %p65 = scmp.ne.s32.totalorder %s54, %s55
      %p66 = scmp.eq.s32.totalorder %s20, 0
      %p67 = por %p65, %p66
      %p68 = scmp.ne.s32.totalorder %s54, %s55
      %p69 = scmp.eq.s32.totalorder %s21, 1
      %p70 = por %p68, %p69
      %p72 = scmp.ne.s32.totalorder %s55, %s71
      %p73 = scmp.eq.s32.totalorder %s21, 0
      %p74 = por %p72, %p73
      %s76 = sadd.s32 %s75, 1
      %p79 = scmp.eq.s32.totalorder %s15, 1
      %p80 = scmp.ne.s32.totalorder %s75, %s77
      %p81 = scmp.eq.s32.totalorder %s15, 0
      %p82 = por %p80, %p81
      %p83 = scmp.ne.s32.totalorder %s75, %s77
      %p84 = scmp.eq.s32.totalorder %s20, 1
      %p85 = por %p83, %p84
      %p86 = scmp.ne.s32.totalorder %s77, %s78
      %p87 = scmp.eq.s32.totalorder %s20, 0
      %p88 = por %p86, %p87
      %p89 = scmp.ne.s32.totalorder %s77, %s78
      %p90 = scmp.eq.s32.totalorder %s21, 1
      %p91 = por %p89, %p90
      %p93 = scmp.ne.s32.totalorder %s78, %s92
      %p94 = scmp.eq.s32.totalorder %s21, 0
      %p95 = por %p93, %p94
      %s97 = sadd.s32 %s96, 1
      %p100 = scmp.eq.s32.totalorder %s15, 1
      %p101 = scmp.ne.s32.totalorder %s96, %s98
      %p102 = scmp.eq.s32.totalorder %s15, 0
      %p103 = por %p101, %p102
      %p104 = scmp.ne.s32.totalorder %s96, %s98
      %p105 = scmp.eq.s32.totalorder %s20, 1
      %p106 = por %p104, %p105
      %p107 = scmp.ne.s32.totalorder %s98, %s99
      %p108 = scmp.eq.s32.totalorder %s20, 0
      %p109 = por %p107, %p108
      %p110 = scmp.ne.s32.totalorder %s98, %s99
      %p111 = scmp.eq.s32.totalorder %s21, 1
      %p112 = por %p110, %p111
      %p114 = scmp.ne.s32.totalorder %s99, %s113
      %p115 = scmp.eq.s32.totalorder %s21, 0
      %p116 = por %p114, %p115
      %s118 = sadd.s32 %s117, 1
      %p121 = scmp.eq.s32.totalorder %s15, 1
      %p122 = scmp.ne.s32.totalorder %s117, %s119
      %p123 = scmp.eq.s32.totalorder %s15, 0
      %p124 = por %p122, %p123
      %p125 = scmp.ne.s32.totalorder %s117, %s119
      %p126 = scmp.eq.s32.totalorder %s20, 1
      %p127 = por %p125, %p126
      %p128 = scmp.ne.s32.totalorder %s119, %s120
      %p129 = scmp.eq.s32.totalorder %s20, 0
      %p130 = por %p128, %p129
      %p131 = scmp.ne.s32.totalorder %s119, %s120
      %p132 = scmp.eq.s32.totalorder %s21, 1
      %p133 = por %p131, %p132
      %p135 = scmp.ne.s32.totalorder %s120, %s134
      %p136 = scmp.eq.s32.totalorder %s21, 0
      %p137 = por %p135, %p136
      %s138 = ssub.s32 %s15, %s22
      %p139 = scmp.eq.s32.totalorder %s138, 0
      %s141 = sadd.s32 %s140, 1
      %s142 = scalar_select %p139, %s140, %s141
      %p145 = pneg %p139
      %p146 = scmp.eq.s32.totalorder %s15, 1
      %p147 = por %p145, %p146
      %p148 = scmp.ne.s32.totalorder %s140, %s143
      %p149 = scmp.eq.s32.totalorder %s15, 0
      %p150 = por %p148, %p149
      %p151 = scmp.ne.s32.totalorder %s140, %s143
      %p152 = scmp.eq.s32.totalorder %s20, 1
      %p153 = por %p151, %p152
      %p154 = scmp.ne.s32.totalorder %s143, %s144
      %p155 = scmp.eq.s32.totalorder %s20, 0
      %p156 = por %p154, %p155
      %p157 = scmp.ne.s32.totalorder %s143, %s144
      %p158 = scmp.eq.s32.totalorder %s21, 1
      %p159 = por %p157, %p158
      %p161 = scmp.ne.s32.totalorder %s144, %s160
      %p162 = scmp.eq.s32.totalorder %s21, 0
      %p163 = por %p161, %p162
      %p164 = scmp.le.s32.totalorder 1, %s15
      %p165 = scmp.lt.s32.totalorder %s15, 3
      %p166 = pnand %p164, %p165
      %p167 = pneg %p166
      // Predicated region
      $region9: #{tpu_custom_call.1} parent=5 // pred_check
        _
      $region10: #{tpu_custom_call.1} parent=5 // pred_check_branch
        %169 = sbr.rel (%p166) target = $region12
      $region11: #{tpu_custom_call.1} parent=5 // pred_region
        %s170 = ssub.s32 %s15, 1
        // Predicated region
        $region13: #{tpu_custom_call.1} parent=11 // pred_check
          %p171 = pneg %p88
        $region14: #{tpu_custom_call.1} parent=11 // pred_check_branch
          %173 = sbr.rel (%p171) target = $region16
        $region15: #{tpu_custom_call.1} parent=11 // pred_region
          _
        $region16: #{tpu_custom_call.1} parent=11 // pred_fallthru
          _
        // Predicated region
        $region17: #{tpu_custom_call.1} parent=11 // pred_check
          %p174 = pneg %p109
        $region18: #{tpu_custom_call.1} parent=11 // pred_check_branch
          %176 = sbr.rel (%p174) target = $region20
        $region19: #{tpu_custom_call.1} parent=11 // pred_region
          %s178 = ssub.s32 3072, 3072
          %179 = vsyncadd [#allocation3], %s178
          %s180 = sshll.u32 [#allocation2], 4
          %s181 = int_to_ptr.vmem [resolvable:$true] %s180
          %186 = dma.hbm_to_vmem [thread:$0]  %s3, 3072, %s181, [#allocation3], 64, 64, 4
        $region20: #{tpu_custom_call.1} parent=11 // pred_fallthru
          _
        // Predicated region
        $region21: #{tpu_custom_call.1} parent=11 // pred_check
          %p187 = pneg %p130
        $region22: #{tpu_custom_call.1} parent=11 // pred_check_branch
          %189 = sbr.rel (%p187) target = $region24
        $region23: #{tpu_custom_call.1} parent=11 // pred_region
          _
        $region24: #{tpu_custom_call.1} parent=11 // pred_fallthru
          _
      $region12: #{tpu_custom_call.1} parent=5 // pred_fallthru
        _
      %p190 = scmp.lt.s32.totalorder %s15, 2
      // Predicated region
      $region25: #{tpu_custom_call.1} parent=5 // pred_check
        %p191 = pneg %p190
      $region26: #{tpu_custom_call.1} parent=5 // pred_check_branch
        %193 = sbr.rel (%p191) target = $region28
      $region27: #{tpu_custom_call.1} parent=5 // pred_region
        // Predicated region
        $region29: #{tpu_custom_call.1} parent=27 // pred_check
          %p194 = pneg %p35
        $region30: #{tpu_custom_call.1} parent=27 // pred_check_branch
          %196 = sbr.rel (%p194) target = $region32
        $region31: #{tpu_custom_call.1} parent=27 // pred_region
          %p197 = scmp.lt.s32.totalorder %s15, 1
          %s198 = scalar_select %p197, %s15, 1
          %s199 = scalar_lea.vmem %s0, %s198
        $region32: #{tpu_custom_call.1} parent=27 // pred_fallthru
          _
        // Predicated region
        $region33: #{tpu_custom_call.1} parent=27 // pred_check
          %p200 = pneg %p61
        $region34: #{tpu_custom_call.1} parent=27 // pred_check_branch
          %202 = sbr.rel (%p200) target = $region36
        $region35: #{tpu_custom_call.1} parent=27 // pred_region
          %p203 = scmp.lt.s32.totalorder %s15, 1
          %s204 = scalar_select %p203, %s15, 1
          %s205 = scalar_lea.vmem %s1, %s204
        $region36: #{tpu_custom_call.1} parent=27 // pred_fallthru
          _
      $region28: #{tpu_custom_call.1} parent=5 // pred_fallthru
        _
      %p206 = scmp.le.s32.totalorder 1, %s15
      %p207 = scmp.lt.s32.totalorder %s15, 3
      %p208 = pnand %p206, %p207
      %p209 = pneg %p208
      // Predicated region
      $region37: #{tpu_custom_call.1} parent=5 // pred_check
        _
      $region38: #{tpu_custom_call.1} parent=5 // pred_check_branch
        %211 = sbr.rel (%p208) target = $region40
      $region39: #{tpu_custom_call.1} parent=5 // pred_region
        %s212 = ssub.s32 %s15, 1
        // Predicated region
        $region41: #{tpu_custom_call.1} parent=39 // pred_check
          %p213 = pneg %p109
        $region42: #{tpu_custom_call.1} parent=39 // pred_check_branch
          %215 = sbr.rel (%p213) target = $region44
        $region43: #{tpu_custom_call.1} parent=39 // pred_region
          %216 = dma.done [#allocation3], 3072
        $region44: #{tpu_custom_call.1} parent=39 // pred_fallthru
          _
        %p217 = scmp.lt.s32.totalorder %s20, 1
        %s218 = scalar_select %p217, %s20, 1
        %s219 = scalar_lea.vmem %s0, %s218
        %p220 = pneg %p41
        %p221 = pneg %p38
        %p222 = scmp.lt.s32.totalorder %s20, 1
        %s223 = scalar_select %p222, %s20, 1
        %s224 = scalar_lea.vmem %s1, %s223
        %p225 = pneg %p67
        %p226 = pneg %p64
        %p227 = pneg %p88
        %p228 = pneg %p85
        %p229 = pneg %p109
        %p230 = pneg %p106
        %p231 = pneg %p130
        %p232 = pneg %p127
        %p233 = pneg %p156
        %p234 = pneg %p153
        %s235 = sand.u32 %s143, 1
        %s236 = scalar_lea.sflag [#allocation4], %s235
        %s237 = sand.u32 %s143, 1
        %s238 = scalar_lea.vmem [#allocation5], %s237
        %p239 = scmp.lt.s32.totalorder %s20, 1
        %s240 = scalar_select %p239, %s20, 1
        %s241 = scalar_lea.vmem %s0, %s240
        %p242 = scmp.lt.s32.totalorder %s20, 1
        %s243 = scalar_select %p242, %s20, 1
        %s244 = scalar_lea.vmem %s1, %s243
        %v246 = vld [vmem:[%s241] sm:$0x1]
        %v247 = vld [vmem:[%s244] sm:$0x1]
        %v248 = vlaneseq
        %v249 = vshrl.u32 %v248, 7
        %v250 = vadd.s32 %v249, 8
        %v251 = vadd.s32 %v249, 16
        %v252 = vadd.s32 %v249, 24
        %v253 = vadd.s32 %v249, 32
        %v254 = vadd.s32 %v249, 40
        %v255 = vadd.s32 %v249, 48
        %v256 = vadd.s32 %v249, 56
        %v257 = vadd.s32 %v249, 64
        %v258 = vadd.s32 %v249, 72
        %v259 = vadd.s32 %v249, 80
        %v260 = vadd.s32 %v249, 88
        %v261 = vadd.s32 %v249, 96
        %v262 = vadd.s32 %v249, 104
        %v263 = vadd.s32 %v249, 112
        %v264 = vadd.s32 %v249, 120
        %v265 = vlaneseq
        %v266 = vshrl.u32 %v265, 7
        %v267 = vsub.s32 0, %v266
        %v268 = vrot.slane %v246, %v267
        %vm269 = vcmp.eq.s32.totalorder %v249, %v268
        %vm270 = vcmp.eq.s32.totalorder %v250, %v268
        %vm271 = vcmp.eq.s32.totalorder %v251, %v268
        %vm272 = vcmp.eq.s32.totalorder %v252, %v268
        %vm273 = vcmp.eq.s32.totalorder %v253, %v268
        %vm274 = vcmp.eq.s32.totalorder %v254, %v268
        %vm275 = vcmp.eq.s32.totalorder %v255, %v268
        %vm276 = vcmp.eq.s32.totalorder %v256, %v268
        %vm277 = vcmp.eq.s32.totalorder %v257, %v268
        %vm278 = vcmp.eq.s32.totalorder %v258, %v268
        %vm279 = vcmp.eq.s32.totalorder %v259, %v268
        %vm280 = vcmp.eq.s32.totalorder %v260, %v268
        %vm281 = vcmp.eq.s32.totalorder %v261, %v268
        %vm282 = vcmp.eq.s32.totalorder %v262, %v268
        %vm283 = vcmp.eq.s32.totalorder %v263, %v268
        %vm284 = vcmp.eq.s32.totalorder %v264, %v268
        %v285 = vadd.s32 %v247, 32
        %v286 = vlaneseq
        %v287 = vshrl.u32 %v286, 7
        %v288 = vsub.s32 0, %v287
        %v289 = vrot.slane %v285, %v288
        %vm290 = vcmp.eq.s32.totalorder %v249, %v289
        %vm291 = vcmp.eq.s32.totalorder %v250, %v289
        %vm292 = vcmp.eq.s32.totalorder %v251, %v289
        %vm293 = vcmp.eq.s32.totalorder %v252, %v289
        %vm294 = vcmp.eq.s32.totalorder %v253, %v289
        %vm295 = vcmp.eq.s32.totalorder %v254, %v289
        %vm296 = vcmp.eq.s32.totalorder %v255, %v289
        %vm297 = vcmp.eq.s32.totalorder %v256, %v289
        %vm298 = vcmp.eq.s32.totalorder %v257, %v289
        %vm299 = vcmp.eq.s32.totalorder %v258, %v289
        %vm300 = vcmp.eq.s32.totalorder %v259, %v289
        %vm301 = vcmp.eq.s32.totalorder %v260, %v289
        %vm302 = vcmp.eq.s32.totalorder %v261, %v289
        %vm303 = vcmp.eq.s32.totalorder %v262, %v289
        %vm304 = vcmp.eq.s32.totalorder %v263, %v289
        %vm305 = vcmp.eq.s32.totalorder %v264, %v289
        %vm306 = vmor %vm269, %vm290
        %vm307 = vmor %vm270, %vm291
        %vm308 = vmor %vm271, %vm292
        %vm309 = vmor %vm272, %vm293
        %vm310 = vmor %vm273, %vm294
        %vm311 = vmor %vm274, %vm295
        %vm312 = vmor %vm275, %vm296
        %vm313 = vmor %vm276, %vm297
        %vm314 = vmor %vm277, %vm298
        %vm315 = vmor %vm278, %vm299
        %vm316 = vmor %vm279, %vm300
        %vm317 = vmor %vm280, %vm301
        %vm318 = vmor %vm281, %vm302
        %vm319 = vmor %vm282, %vm303
        %vm320 = vmor %vm283, %vm304
        %vm321 = vmor %vm284, %vm305
        %v322 = vsel %vm306, 1, 0
        %v323 = vsel %vm307, 1, 0
        %v324 = vsel %vm308, 1, 0
        %v325 = vsel %vm309, 1, 0
        %v326 = vsel %vm310, 1, 0
        %v327 = vsel %vm311, 1, 0
        %v328 = vsel %vm312, 1, 0
        %v329 = vsel %vm313, 1, 0
        %v330 = vsel %vm314, 1, 0
        %v331 = vsel %vm315, 1, 0
        %v332 = vsel %vm316, 1, 0
        %v333 = vsel %vm317, 1, 0
        %v334 = vsel %vm318, 1, 0
        %v335 = vsel %vm319, 1, 0
        %v336 = vsel %vm320, 1, 0
        %v337 = vsel %vm321, 1, 0
        %v338 = vcvt.s32.f32 %v322
        %v339 = vcvt.s32.f32 %v323
        %v340 = vcvt.s32.f32 %v324
        %v341 = vcvt.s32.f32 %v325
        %v342 = vcvt.s32.f32 %v326
        %v343 = vcvt.s32.f32 %v327
        %v344 = vcvt.s32.f32 %v328
        %v345 = vcvt.s32.f32 %v329
        %v346 = vcvt.s32.f32 %v330
        %v347 = vcvt.s32.f32 %v331
        %v348 = vcvt.s32.f32 %v332
        %v349 = vcvt.s32.f32 %v333
        %v350 = vcvt.s32.f32 %v334
        %v351 = vcvt.s32.f32 %v335
        %v352 = vcvt.s32.f32 %v336
        %v353 = vcvt.s32.f32 %v337
        %v354 = vpack.c.bf16 %v339, %v338
        %v355 = vpack.c.bf16 %v341, %v340
        %v356 = vpack.c.bf16 %v343, %v342
        %v357 = vpack.c.bf16 %v345, %v344
        %v358 = vpack.c.bf16 %v347, %v346
        %v359 = vpack.c.bf16 %v349, %v348
        %v360 = vpack.c.bf16 %v351, %v350
        %v361 = vpack.c.bf16 %v353, %v352
        %v362 = vld [vmem:[%s2] sm:$0xf]
        %v363 = vld [vmem:[%s2 + $0x4] sm:$0xf]
        %v364 = vld [vmem:[%s2 + $0x8] sm:$0xf]
        %v365 = vld [vmem:[%s2 + $0xc] sm:$0xf]
        %v366 = vld [vmem:[%s2 + $0x10] sm:$0xf]
        %v367 = vld [vmem:[%s2 + $0x14] sm:$0xf]
        %v368 = vld [vmem:[%s2 + $0x18] sm:$0xf]
        %v369 = vld [vmem:[%s2 + $0x1c] sm:$0xf]
        %v370 = vld [vmem:[%s2 + $0x20] sm:$0xf]
        %v371 = vld [vmem:[%s2 + $0x24] sm:$0xf]
        %v372 = vld [vmem:[%s2 + $0x28] sm:$0xf]
        %v373 = vld [vmem:[%s2 + $0x2c] sm:$0xf]
        %v374 = vld [vmem:[%s2 + $0x30] sm:$0xf]
        %v375 = vld [vmem:[%s2 + $0x34] sm:$0xf]
        %v376 = vld [vmem:[%s2 + $0x38] sm:$0xf]
        %v377 = vld [vmem:[%s2 + $0x3c] sm:$0xf]
        %v378 = vld [vmem:[%s4] sm:$0xff]
        %v379 = vld [vmem:[%s4 + $0x8] sm:$0xff]
        %v380 = vld [vmem:[%s4 + $0x10] sm:$0xff]
        %v381 = vld [vmem:[%s4 + $0x18] sm:$0xff]
        %v382 = vld [vmem:[%s4 + $0x20] sm:$0xff]
        %v383 = vld [vmem:[%s4 + $0x28] sm:$0xff]
        %v384 = vld [vmem:[%s4 + $0x30] sm:$0xff]
        %v385 = vld [vmem:[%s4 + $0x38] sm:$0xff]
        %v386 = vld [vmem:[%s4 + $0x40] sm:$0xff]
        %v387 = vld [vmem:[%s4 + $0x48] sm:$0xff]
        %v388 = vld [vmem:[%s4 + $0x50] sm:$0xff]
        %v389 = vld [vmem:[%s4 + $0x58] sm:$0xff]
        %v390 = vld [vmem:[%s4 + $0x60] sm:$0xff]
        %v391 = vld [vmem:[%s4 + $0x68] sm:$0xff]
        %v392 = vld [vmem:[%s4 + $0x70] sm:$0xff]
        %v393 = vld [vmem:[%s4 + $0x78] sm:$0xff]
        %395 = vset.pattern.permute.xlu0 0
        %396 = vperm.xlu0 %395, %v378
        %v397 = vpop.permute.xlu0 %396
        %400 = vset.pattern.permute.xlu0 0
        %401 = vperm.xlu0 %400, %v379
        %v402 = vpop.permute.xlu0 %401
        %405 = vset.pattern.permute.xlu0 0
        %406 = vperm.xlu0 %405, %v380
        %v407 = vpop.permute.xlu0 %406
        %410 = vset.pattern.permute.xlu0 0
        %411 = vperm.xlu0 %410, %v381
        %v412 = vpop.permute.xlu0 %411
        %415 = vset.pattern.permute.xlu0 0
        %416 = vperm.xlu0 %415, %v382
        %v417 = vpop.permute.xlu0 %416
        %420 = vset.pattern.permute.xlu0 0
        %421 = vperm.xlu0 %420, %v383
        %v422 = vpop.permute.xlu0 %421
        %425 = vset.pattern.permute.xlu0 0
        %426 = vperm.xlu0 %425, %v384
        %v427 = vpop.permute.xlu0 %426
        %430 = vset.pattern.permute.xlu0 0
        %431 = vperm.xlu0 %430, %v385
        %v432 = vpop.permute.xlu0 %431
        %435 = vset.pattern.permute.xlu0 0
        %436 = vperm.xlu0 %435, %v386
        %v437 = vpop.permute.xlu0 %436
        %440 = vset.pattern.permute.xlu0 0
        %441 = vperm.xlu0 %440, %v387
        %v442 = vpop.permute.xlu0 %441
        %445 = vset.pattern.permute.xlu0 0
        %446 = vperm.xlu0 %445, %v388
        %v447 = vpop.permute.xlu0 %446
        %450 = vset.pattern.permute.xlu0 0
        %451 = vperm.xlu0 %450, %v389
        %v452 = vpop.permute.xlu0 %451
        %455 = vset.pattern.permute.xlu0 0
        %456 = vperm.xlu0 %455, %v390
        %v457 = vpop.permute.xlu0 %456
        %460 = vset.pattern.permute.xlu0 0
        %461 = vperm.xlu0 %460, %v391
        %v462 = vpop.permute.xlu0 %461
        %465 = vset.pattern.permute.xlu0 0
        %466 = vperm.xlu0 %465, %v392
        %v467 = vpop.permute.xlu0 %466
        %470 = vset.pattern.permute.xlu0 0
        %471 = vperm.xlu0 %470, %v393
        %v472 = vpop.permute.xlu0 %471
        %v490 = vunpack.c.l.b16 %v362
        %v491 = vunpack.c.l.b16 %v363
        %v492 = vunpack.c.l.b16 %v364
        %v493 = vunpack.c.l.b16 %v365
        %v494 = vunpack.c.l.b16 %v366
        %v495 = vunpack.c.l.b16 %v367
        %v496 = vunpack.c.l.b16 %v368
        %v497 = vunpack.c.l.b16 %v369
        %v498 = vunpack.c.l.b16 %v370
        %v499 = vunpack.c.l.b16 %v371
        %v500 = vunpack.c.l.b16 %v372
        %v501 = vunpack.c.l.b16 %v373
        %v502 = vunpack.c.l.b16 %v374
        %v503 = vunpack.c.l.b16 %v375
        %v504 = vunpack.c.l.b16 %v376
        %v505 = vunpack.c.l.b16 %v377
        %v506 = vpack.c.b16 %v491, %v490
        %v507 = vpack.c.b16 %v493, %v492
        %v508 = vpack.c.b16 %v495, %v494
        %v509 = vpack.c.b16 %v497, %v496
        %v510 = vpack.c.b16 %v499, %v498
        %v511 = vpack.c.b16 %v501, %v500
        %v512 = vpack.c.b16 %v503, %v502
        %v513 = vpack.c.b16 %v505, %v504
        %522 = vmatprep.subr.bf16.mxu0 0
        %523 = vmatpush1.bf16.msra.mxu0 %v361
        %524 = vmatprep.subr.bf16.mxu0 0
        %525 = vmatpush1.bf16.msra.mxu0 %v360
        %526 = vmatprep.subr.bf16.mxu0 0
        %527 = vmatpush1.bf16.msra.mxu0 %v359
        %528 = vmatprep.subr.bf16.mxu0 0
        %529 = vmatpush1.bf16.msra.mxu0 %v358
        %530 = vmatprep.subr.bf16.mxu0 0
        %531 = vmatpush1.bf16.msra.mxu0 %v357
        %532 = vmatprep.subr.bf16.mxu0 0
        %533 = vmatpush1.bf16.msra.mxu0 %v356
        %534 = vmatprep.subr.bf16.mxu0 0
        %535 = vmatpush1.bf16.msra.mxu0 %v355
        %536 = vmatprep.subr.bf16.mxu0 0
        %537 = vmatpush1.bf16.msra.mxu0 %v354
        %538 = vmatprep.subr.bf16.mxu0 0
        %539 = vmatpush2.bf16.msra.mxu0 0
        %540 = vmatprep.subr.bf16.mxu0 0
        %541 = vmatpush2.bf16.msra.mxu0 0
        %542 = vmatprep.subr.bf16.mxu0 0
        %543 = vmatpush2.bf16.msra.mxu0 0
        %544 = vmatprep.subr.bf16.mxu0 0
        %545 = vmatpush2.bf16.msra.mxu0 0
        %546 = vmatprep.subr.bf16.mxu0 0
        %547 = vmatpush2.bf16.msra.mxu0 0
        %548 = vmatprep.subr.bf16.mxu0 0
        %549 = vmatpush2.bf16.msra.mxu0 0
        %550 = vmatprep.subr.bf16.mxu0 0
        %551 = vmatpush2.bf16.msra.mxu0 0
        %552 = vmatprep.subr.bf16.mxu0 0
        %553 = vmatpush2.bf16.msra.mxu0 0
        %554 = vmatprep.mubr.bf16.mxu0 0
        %555 = vmatmul.mubr.bf16.gmra.mxu0 %v506
        %v556 = vpop.f32.mrf.mxu0
        %v557 = vadd.f32 %v397, %v556
        %v558 = vpop.f32.mrf.mxu0
        %v559 = vpop.f32.mrf.mxu0
        %v560 = vadd.f32 %v402, %v559
        %v561 = vpop.f32.mrf.mxu0
        %562 = vmatprep.mubr.bf16.mxu0 0
        %563 = vmatmul.mubr.bf16.gmra.mxu0 %v507
        %v564 = vpop.f32.mrf.mxu0
        %v565 = vadd.f32 %v407, %v564
        %v566 = vpop.f32.mrf.mxu0
        %v567 = vpop.f32.mrf.mxu0
        %v568 = vadd.f32 %v412, %v567
        %v569 = vpop.f32.mrf.mxu0
        %570 = vmatprep.mubr.bf16.mxu0 0
        %571 = vmatmul.mubr.bf16.gmra.mxu0 %v508
        %v572 = vpop.f32.mrf.mxu0
        %v573 = vadd.f32 %v417, %v572
        %v574 = vpop.f32.mrf.mxu0
        %v575 = vpop.f32.mrf.mxu0
        %v576 = vadd.f32 %v422, %v575
        %v577 = vpop.f32.mrf.mxu0
        %578 = vmatprep.mubr.bf16.mxu0 0
        %579 = vmatmul.mubr.bf16.gmra.mxu0 %v509
        %v580 = vpop.f32.mrf.mxu0
        %v581 = vadd.f32 %v427, %v580
        %v582 = vpop.f32.mrf.mxu0
        %v583 = vpop.f32.mrf.mxu0
        %v584 = vadd.f32 %v432, %v583
        %v585 = vpop.f32.mrf.mxu0
        %586 = vmatprep.mubr.bf16.mxu0 0
        %587 = vmatmul.mubr.bf16.gmra.mxu0 %v510
        %v588 = vpop.f32.mrf.mxu0
        %v589 = vadd.f32 %v437, %v588
        %v590 = vpop.f32.mrf.mxu0
        %v591 = vpop.f32.mrf.mxu0
        %v592 = vadd.f32 %v442, %v591
        %v593 = vpop.f32.mrf.mxu0
        %594 = vmatprep.mubr.bf16.mxu0 0
        %595 = vmatmul.mubr.bf16.gmra.mxu0 %v511
        %v596 = vpop.f32.mrf.mxu0
        %v597 = vadd.f32 %v447, %v596
        %v598 = vpop.f32.mrf.mxu0
        %v599 = vpop.f32.mrf.mxu0
        %v600 = vadd.f32 %v452, %v599
        %v601 = vpop.f32.mrf.mxu0
        %602 = vmatprep.mubr.bf16.mxu0 0
        %603 = vmatmul.mubr.bf16.gmra.mxu0 %v512
        %v604 = vpop.f32.mrf.mxu0
        %v605 = vadd.f32 %v457, %v604
        %v606 = vpop.f32.mrf.mxu0
        %v607 = vpop.f32.mrf.mxu0
        %v608 = vadd.f32 %v462, %v607
        %v609 = vpop.f32.mrf.mxu0
        %610 = vmatprep.mubr.bf16.mxu0 0
        %611 = vmatmul.mubr.bf16.gmra.mxu0 %v513
        %v612 = vpop.f32.mrf.mxu0
        %v613 = vadd.f32 %v467, %v612
        %v614 = vpop.f32.mrf.mxu0
        %v615 = vpop.f32.mrf.mxu0
        %v616 = vadd.f32 %v472, %v615
        %v617 = vpop.f32.mrf.mxu0
        %618 = vdwg.mxu0
        %v619 = vmax.f32 %v557, 0.0
        %v620 = vmax.f32 %v560, 0.0
        %v621 = vmax.f32 %v565, 0.0
        %v622 = vmax.f32 %v568, 0.0
        %v623 = vmax.f32 %v573, 0.0
        %v624 = vmax.f32 %v576, 0.0
        %v625 = vmax.f32 %v581, 0.0
        %v626 = vmax.f32 %v584, 0.0
        %v627 = vmax.f32 %v589, 0.0
        %v628 = vmax.f32 %v592, 0.0
        %v629 = vmax.f32 %v597, 0.0
        %v630 = vmax.f32 %v600, 0.0
        %v631 = vmax.f32 %v605, 0.0
        %v632 = vmax.f32 %v608, 0.0
        %v633 = vmax.f32 %v613, 0.0
        %v634 = vmax.f32 %v616, 0.0
        %v635 = vld [vmem:[#allocation2] sm:$0xf]
        %v636 = vld [vmem:[#allocation2 + $0x4] sm:$0xf]
        %v637 = vld [vmem:[#allocation2 + $0x8] sm:$0xf]
        %v638 = vld [vmem:[#allocation2 + $0xc] sm:$0xf]
        %v639 = vld [vmem:[#allocation2 + $0x10] sm:$0xf]
        %v640 = vld [vmem:[#allocation2 + $0x14] sm:$0xf]
        %v641 = vld [vmem:[#allocation2 + $0x18] sm:$0xf]
        %v642 = vld [vmem:[#allocation2 + $0x1c] sm:$0xf]
        %v643 = vld [vmem:[#allocation2 + $0x20] sm:$0xf]
        %v644 = vld [vmem:[#allocation2 + $0x24] sm:$0xf]
        %v645 = vld [vmem:[#allocation2 + $0x28] sm:$0xf]
        %v646 = vld [vmem:[#allocation2 + $0x2c] sm:$0xf]
        %v647 = vld [vmem:[#allocation2 + $0x30] sm:$0xf]
        %v648 = vld [vmem:[#allocation2 + $0x34] sm:$0xf]
        %v649 = vld [vmem:[#allocation2 + $0x38] sm:$0xf]
        %v650 = vld [vmem:[#allocation2 + $0x3c] sm:$0xf]
        %v651 = vpack.c.bf16 %v620, %v619
        %v652 = vpack.c.bf16 %v622, %v621
        %v653 = vpack.c.bf16 %v624, %v623
        %v654 = vpack.c.bf16 %v626, %v625
        %v655 = vpack.c.bf16 %v628, %v627
        %v656 = vpack.c.bf16 %v630, %v629
        %v657 = vpack.c.bf16 %v632, %v631
        %v658 = vpack.c.bf16 %v634, %v633
        %659 = vset.pattern.permute.xlu0 1
        %660 = vperm.xlu0 %659, %v378
        %v661 = vpop.permute.xlu0 %660
        %663 = vset.pattern.permute.xlu0 1
        %664 = vperm.xlu0 %663, %v379
        %v665 = vpop.permute.xlu0 %664
        %667 = vset.pattern.permute.xlu0 1
        %668 = vperm.xlu0 %667, %v380
        %v669 = vpop.permute.xlu0 %668
        %671 = vset.pattern.permute.xlu0 1
        %672 = vperm.xlu0 %671, %v381
        %v673 = vpop.permute.xlu0 %672
        %675 = vset.pattern.permute.xlu0 1
        %676 = vperm.xlu0 %675, %v382
        %v677 = vpop.permute.xlu0 %676
        %679 = vset.pattern.permute.xlu0 1
        %680 = vperm.xlu0 %679, %v383
        %v681 = vpop.permute.xlu0 %680
        %683 = vset.pattern.permute.xlu0 1
        %684 = vperm.xlu0 %683, %v384
        %v685 = vpop.permute.xlu0 %684
        %687 = vset.pattern.permute.xlu0 1
        %688 = vperm.xlu0 %687, %v385
        %v689 = vpop.permute.xlu0 %688
        %691 = vset.pattern.permute.xlu0 1
        %692 = vperm.xlu0 %691, %v386
        %v693 = vpop.permute.xlu0 %692
        %695 = vset.pattern.permute.xlu0 1
        %696 = vperm.xlu0 %695, %v387
        %v697 = vpop.permute.xlu0 %696
        %699 = vset.pattern.permute.xlu0 1
        %700 = vperm.xlu0 %699, %v388
        %v701 = vpop.permute.xlu0 %700
        %703 = vset.pattern.permute.xlu0 1
        %704 = vperm.xlu0 %703, %v389
        %v705 = vpop.permute.xlu0 %704
        %707 = vset.pattern.permute.xlu0 1
        %708 = vperm.xlu0 %707, %v390
        %v709 = vpop.permute.xlu0 %708
        %711 = vset.pattern.permute.xlu0 1
        %712 = vperm.xlu0 %711, %v391
        %v713 = vpop.permute.xlu0 %712
        %715 = vset.pattern.permute.xlu0 1
        %716 = vperm.xlu0 %715, %v392
        %v717 = vpop.permute.xlu0 %716
        %719 = vset.pattern.permute.xlu0 1
        %720 = vperm.xlu0 %719, %v393
        %v721 = vpop.permute.xlu0 %720
        %v739 = vunpack.c.l.b16 %v635
        %v740 = vunpack.c.l.b16 %v636
        %v741 = vunpack.c.l.b16 %v637
        %v742 = vunpack.c.l.b16 %v638
        %v743 = vunpack.c.l.b16 %v639
        %v744 = vunpack.c.l.b16 %v640
        %v745 = vunpack.c.l.b16 %v641
        %v746 = vunpack.c.l.b16 %v642
        %v747 = vunpack.c.l.b16 %v643
        %v748 = vunpack.c.l.b16 %v644
        %v749 = vunpack.c.l.b16 %v645
        %v750 = vunpack.c.l.b16 %v646
        %v751 = vunpack.c.l.b16 %v647
        %v752 = vunpack.c.l.b16 %v648
        %v753 = vunpack.c.l.b16 %v649
        %v754 = vunpack.c.l.b16 %v650
        %v755 = vpack.c.b16 %v740, %v739
        %v756 = vpack.c.b16 %v742, %v741
        %v757 = vpack.c.b16 %v744, %v743
        %v758 = vpack.c.b16 %v746, %v745
        %v759 = vpack.c.b16 %v748, %v747
        %v760 = vpack.c.b16 %v750, %v749
        %v761 = vpack.c.b16 %v752, %v751
        %v762 = vpack.c.b16 %v754, %v753
        %771 = vmatprep.subr.bf16.mxu0 0
        %772 = vmatpush1.bf16.msra.mxu0 %v658
        %773 = vmatprep.subr.bf16.mxu0 0
        %774 = vmatpush1.bf16.msra.mxu0 %v657
        %775 = vmatprep.subr.bf16.mxu0 0
        %776 = vmatpush1.bf16.msra.mxu0 %v656
        %777 = vmatprep.subr.bf16.mxu0 0
        %778 = vmatpush1.bf16.msra.mxu0 %v655
        %779 = vmatprep.subr.bf16.mxu0 0
        %780 = vmatpush1.bf16.msra.mxu0 %v654
        %781 = vmatprep.subr.bf16.mxu0 0
        %782 = vmatpush1.bf16.msra.mxu0 %v653
        %783 = vmatprep.subr.bf16.mxu0 0
        %784 = vmatpush1.bf16.msra.mxu0 %v652
        %785 = vmatprep.subr.bf16.mxu0 0
        %786 = vmatpush1.bf16.msra.mxu0 %v651
        %787 = vmatprep.subr.bf16.mxu0 0
        %788 = vmatpush2.bf16.msra.mxu0 0
        %789 = vmatprep.subr.bf16.mxu0 0
        %790 = vmatpush2.bf16.msra.mxu0 0
        %791 = vmatprep.subr.bf16.mxu0 0
        %792 = vmatpush2.bf16.msra.mxu0 0
        %793 = vmatprep.subr.bf16.mxu0 0
        %794 = vmatpush2.bf16.msra.mxu0 0
        %795 = vmatprep.subr.bf16.mxu0 0
        %796 = vmatpush2.bf16.msra.mxu0 0
        %797 = vmatprep.subr.bf16.mxu0 0
        %798 = vmatpush2.bf16.msra.mxu0 0
        %799 = vmatprep.subr.bf16.mxu0 0
        %800 = vmatpush2.bf16.msra.mxu0 0
        %801 = vmatprep.subr.bf16.mxu0 0
        %802 = vmatpush2.bf16.msra.mxu0 0
        %803 = vmatprep.mubr.bf16.mxu0 0
        %804 = vmatmul.mubr.bf16.gmra.mxu0 %v755
        %v805 = vpop.f32.mrf.mxu0
        %v806 = vadd.f32 %v661, %v805
        %v807 = vpop.f32.mrf.mxu0
        %v808 = vpop.f32.mrf.mxu0
        %v809 = vadd.f32 %v665, %v808
        %v810 = vpop.f32.mrf.mxu0
        %811 = vmatprep.mubr.bf16.mxu0 0
        %812 = vmatmul.mubr.bf16.gmra.mxu0 %v756
        %v813 = vpop.f32.mrf.mxu0
        %v814 = vadd.f32 %v669, %v813
        %v815 = vpop.f32.mrf.mxu0
        %v816 = vpop.f32.mrf.mxu0
        %v817 = vadd.f32 %v673, %v816
        %v818 = vpop.f32.mrf.mxu0
        %819 = vmatprep.mubr.bf16.mxu0 0
        %820 = vmatmul.mubr.bf16.gmra.mxu0 %v757
        %v821 = vpop.f32.mrf.mxu0
        %v822 = vadd.f32 %v677, %v821
        %v823 = vpop.f32.mrf.mxu0
        %v824 = vpop.f32.mrf.mxu0
        %v825 = vadd.f32 %v681, %v824
        %v826 = vpop.f32.mrf.mxu0
        %827 = vmatprep.mubr.bf16.mxu0 0
        %828 = vmatmul.mubr.bf16.gmra.mxu0 %v758
        %v829 = vpop.f32.mrf.mxu0
        %v830 = vadd.f32 %v685, %v829
        %v831 = vpop.f32.mrf.mxu0
        %v832 = vpop.f32.mrf.mxu0
        %v833 = vadd.f32 %v689, %v832
        %v834 = vpop.f32.mrf.mxu0
        %835 = vmatprep.mubr.bf16.mxu0 0
        %836 = vmatmul.mubr.bf16.gmra.mxu0 %v759
        %v837 = vpop.f32.mrf.mxu0
        %v838 = vadd.f32 %v693, %v837
        %v839 = vpop.f32.mrf.mxu0
        %v840 = vpop.f32.mrf.mxu0
        %v841 = vadd.f32 %v697, %v840
        %v842 = vpop.f32.mrf.mxu0
        %843 = vmatprep.mubr.bf16.mxu0 0
        %844 = vmatmul.mubr.bf16.gmra.mxu0 %v760
        %v845 = vpop.f32.mrf.mxu0
        %v846 = vadd.f32 %v701, %v845
        %v847 = vpop.f32.mrf.mxu0
        %v848 = vpop.f32.mrf.mxu0
        %v849 = vadd.f32 %v705, %v848
        %v850 = vpop.f32.mrf.mxu0
        %851 = vmatprep.mubr.bf16.mxu0 0
        %852 = vmatmul.mubr.bf16.gmra.mxu0 %v761
        %v853 = vpop.f32.mrf.mxu0
        %v854 = vadd.f32 %v709, %v853
        %v855 = vpop.f32.mrf.mxu0
        %v856 = vpop.f32.mrf.mxu0
        %v857 = vadd.f32 %v713, %v856
        %v858 = vpop.f32.mrf.mxu0
        %859 = vmatprep.mubr.bf16.mxu0 0
        %860 = vmatmul.mubr.bf16.gmra.mxu0 %v762
        %v861 = vpop.f32.mrf.mxu0
        %v862 = vadd.f32 %v717, %v861
        %v863 = vpop.f32.mrf.mxu0
        %v864 = vpop.f32.mrf.mxu0
        %v865 = vadd.f32 %v721, %v864
        %v866 = vpop.f32.mrf.mxu0
        %867 = vdwg.mxu0
        %v868 = vmax.f32 %v806, 0.0
        %v869 = vmax.f32 %v809, 0.0
        %v870 = vmax.f32 %v814, 0.0
        %v871 = vmax.f32 %v817, 0.0
        %v872 = vmax.f32 %v822, 0.0
        %v873 = vmax.f32 %v825, 0.0
        %v874 = vmax.f32 %v830, 0.0
        %v875 = vmax.f32 %v833, 0.0
        %v876 = vmax.f32 %v838, 0.0
        %v877 = vmax.f32 %v841, 0.0
        %v878 = vmax.f32 %v846, 0.0
        %v879 = vmax.f32 %v849, 0.0
        %v880 = vmax.f32 %v854, 0.0
        %v881 = vmax.f32 %v857, 0.0
        %v882 = vmax.f32 %v862, 0.0
        %v883 = vmax.f32 %v865, 0.0
        %s884 = scalar_lea.vmem [#allocation2], 64
        %v885 = vld [vmem:[%s884] sm:$0xf]
        %v886 = vld [vmem:[%s884 + $0x4] sm:$0xf]
        %v887 = vld [vmem:[%s884 + $0x8] sm:$0xf]
        %v888 = vld [vmem:[%s884 + $0xc] sm:$0xf]
        %v889 = vld [vmem:[%s884 + $0x10] sm:$0xf]
        %v890 = vld [vmem:[%s884 + $0x14] sm:$0xf]
        %v891 = vld [vmem:[%s884 + $0x18] sm:$0xf]
        %v892 = vld [vmem:[%s884 + $0x1c] sm:$0xf]
        %v893 = vld [vmem:[%s884 + $0x20] sm:$0xf]
        %v894 = vld [vmem:[%s884 + $0x24] sm:$0xf]
        %v895 = vld [vmem:[%s884 + $0x28] sm:$0xf]
        %v896 = vld [vmem:[%s884 + $0x2c] sm:$0xf]
        %v897 = vld [vmem:[%s884 + $0x30] sm:$0xf]
        %v898 = vld [vmem:[%s884 + $0x34] sm:$0xf]
        %v899 = vld [vmem:[%s884 + $0x38] sm:$0xf]
        %v900 = vld [vmem:[%s884 + $0x3c] sm:$0xf]
        %v901 = vpack.c.bf16 %v869, %v868
        %v902 = vpack.c.bf16 %v871, %v870
        %v903 = vpack.c.bf16 %v873, %v872
        %v904 = vpack.c.bf16 %v875, %v874
        %v905 = vpack.c.bf16 %v877, %v876
        %v906 = vpack.c.bf16 %v879, %v878
        %v907 = vpack.c.bf16 %v881, %v880
        %v908 = vpack.c.bf16 %v883, %v882
        %909 = vset.pattern.permute.xlu0 2
        %910 = vperm.xlu0 %909, %v378
        %v911 = vpop.permute.xlu0 %910
        %913 = vset.pattern.permute.xlu0 2
        %914 = vperm.xlu0 %913, %v379
        %v915 = vpop.permute.xlu0 %914
        %917 = vset.pattern.permute.xlu0 2
        %918 = vperm.xlu0 %917, %v380
        %v919 = vpop.permute.xlu0 %918
        %921 = vset.pattern.permute.xlu0 2
        %922 = vperm.xlu0 %921, %v381
        %v923 = vpop.permute.xlu0 %922
        %925 = vset.pattern.permute.xlu0 2
        %926 = vperm.xlu0 %925, %v382
        %v927 = vpop.permute.xlu0 %926
        %929 = vset.pattern.permute.xlu0 2
        %930 = vperm.xlu0 %929, %v383
        %v931 = vpop.permute.xlu0 %930
        %933 = vset.pattern.permute.xlu0 2
        %934 = vperm.xlu0 %933, %v384
        %v935 = vpop.permute.xlu0 %934
        %937 = vset.pattern.permute.xlu0 2
        %938 = vperm.xlu0 %937, %v385
        %v939 = vpop.permute.xlu0 %938
        %941 = vset.pattern.permute.xlu0 2
        %942 = vperm.xlu0 %941, %v386
        %v943 = vpop.permute.xlu0 %942
        %945 = vset.pattern.permute.xlu0 2
        %946 = vperm.xlu0 %945, %v387
        %v947 = vpop.permute.xlu0 %946
        %949 = vset.pattern.permute.xlu0 2
        %950 = vperm.xlu0 %949, %v388
        %v951 = vpop.permute.xlu0 %950
        %953 = vset.pattern.permute.xlu0 2
        %954 = vperm.xlu0 %953, %v389
        %v955 = vpop.permute.xlu0 %954
        %957 = vset.pattern.permute.xlu0 2
        %958 = vperm.xlu0 %957, %v390
        %v959 = vpop.permute.xlu0 %958
        %961 = vset.pattern.permute.xlu0 2
        %962 = vperm.xlu0 %961, %v391
        %v963 = vpop.permute.xlu0 %962
        %965 = vset.pattern.permute.xlu0 2
        %966 = vperm.xlu0 %965, %v392
        %v967 = vpop.permute.xlu0 %966
        %969 = vset.pattern.permute.xlu0 2
        %970 = vperm.xlu0 %969, %v393
        %v971 = vpop.permute.xlu0 %970
        %v989 = vunpack.c.l.b16 %v885
        %v990 = vunpack.c.l.b16 %v886
        %v991 = vunpack.c.l.b16 %v887
        %v992 = vunpack.c.l.b16 %v888
        %v993 = vunpack.c.l.b16 %v889
        %v994 = vunpack.c.l.b16 %v890
        %v995 = vunpack.c.l.b16 %v891
        %v996 = vunpack.c.l.b16 %v892
        %v997 = vunpack.c.l.b16 %v893
        %v998 = vunpack.c.l.b16 %v894
        %v999 = vunpack.c.l.b16 %v895
        %v1000 = vunpack.c.l.b16 %v896
        %v1001 = vunpack.c.l.b16 %v897
        %v1002 = vunpack.c.l.b16 %v898
        %v1003 = vunpack.c.l.b16 %v899
        %v1004 = vunpack.c.l.b16 %v900
        %v1005 = vpack.c.b16 %v990, %v989
        %v1006 = vpack.c.b16 %v992, %v991
        %v1007 = vpack.c.b16 %v994, %v993
        %v1008 = vpack.c.b16 %v996, %v995
        %v1009 = vpack.c.b16 %v998, %v997
        %v1010 = vpack.c.b16 %v1000, %v999
        %v1011 = vpack.c.b16 %v1002, %v1001
        %v1012 = vpack.c.b16 %v1004, %v1003
        %1021 = vmatprep.subr.bf16.mxu0 0
        %1022 = vmatpush1.bf16.msra.mxu0 %v908
        %1023 = vmatprep.subr.bf16.mxu0 0
        %1024 = vmatpush1.bf16.msra.mxu0 %v907
        %1025 = vmatprep.subr.bf16.mxu0 0
        %1026 = vmatpush1.bf16.msra.mxu0 %v906
        %1027 = vmatprep.subr.bf16.mxu0 0
        %1028 = vmatpush1.bf16.msra.mxu0 %v905
        %1029 = vmatprep.subr.bf16.mxu0 0
        %1030 = vmatpush1.bf16.msra.mxu0 %v904
        %1031 = vmatprep.subr.bf16.mxu0 0
        %1032 = vmatpush1.bf16.msra.mxu0 %v903
        %1033 = vmatprep.subr.bf16.mxu0 0
        %1034 = vmatpush1.bf16.msra.mxu0 %v902
        %1035 = vmatprep.subr.bf16.mxu0 0
        %1036 = vmatpush1.bf16.msra.mxu0 %v901
        %1037 = vmatprep.subr.bf16.mxu0 0
        %1038 = vmatpush2.bf16.msra.mxu0 0
        %1039 = vmatprep.subr.bf16.mxu0 0
        %1040 = vmatpush2.bf16.msra.mxu0 0
        %1041 = vmatprep.subr.bf16.mxu0 0
        %1042 = vmatpush2.bf16.msra.mxu0 0
        %1043 = vmatprep.subr.bf16.mxu0 0
        %1044 = vmatpush2.bf16.msra.mxu0 0
        %1045 = vmatprep.subr.bf16.mxu0 0
        %1046 = vmatpush2.bf16.msra.mxu0 0
        %1047 = vmatprep.subr.bf16.mxu0 0
        %1048 = vmatpush2.bf16.msra.mxu0 0
        %1049 = vmatprep.subr.bf16.mxu0 0
        %1050 = vmatpush2.bf16.msra.mxu0 0
        %1051 = vmatprep.subr.bf16.mxu0 0
        %1052 = vmatpush2.bf16.msra.mxu0 0
        %1053 = vmatprep.mubr.bf16.mxu0 0
        %1054 = vmatmul.mubr.bf16.gmra.mxu0 %v1005
        %v1055 = vpop.f32.mrf.mxu0
        %v1056 = vadd.f32 %v911, %v1055
        %v1057 = vpop.f32.mrf.mxu0
        %v1058 = vpop.f32.mrf.mxu0
        %v1059 = vadd.f32 %v915, %v1058
        %v1060 = vpop.f32.mrf.mxu0
        %1061 = vmatprep.mubr.bf16.mxu0 0
        %1062 = vmatmul.mubr.bf16.gmra.mxu0 %v1006
        %v1063 = vpop.f32.mrf.mxu0
        %v1064 = vadd.f32 %v919, %v1063
        %v1065 = vpop.f32.mrf.mxu0
        %v1066 = vpop.f32.mrf.mxu0
        %v1067 = vadd.f32 %v923, %v1066
        %v1068 = vpop.f32.mrf.mxu0
        %1069 = vmatprep.mubr.bf16.mxu0 0
        %1070 = vmatmul.mubr.bf16.gmra.mxu0 %v1007
        %v1071 = vpop.f32.mrf.mxu0
        %v1072 = vadd.f32 %v927, %v1071
        %v1073 = vpop.f32.mrf.mxu0
        %v1074 = vpop.f32.mrf.mxu0
        %v1075 = vadd.f32 %v931, %v1074
        %v1076 = vpop.f32.mrf.mxu0
        %1077 = vmatprep.mubr.bf16.mxu0 0
        %1078 = vmatmul.mubr.bf16.gmra.mxu0 %v1008
        %v1079 = vpop.f32.mrf.mxu0
        %v1080 = vadd.f32 %v935, %v1079
        %v1081 = vpop.f32.mrf.mxu0
        %v1082 = vpop.f32.mrf.mxu0
        %v1083 = vadd.f32 %v939, %v1082
        %v1084 = vpop.f32.mrf.mxu0
        %1085 = vmatprep.mubr.bf16.mxu0 0
        %1086 = vmatmul.mubr.bf16.gmra.mxu0 %v1009
        %v1087 = vpop.f32.mrf.mxu0
        %v1088 = vadd.f32 %v943, %v1087
        %v1089 = vpop.f32.mrf.mxu0
        %v1090 = vpop.f32.mrf.mxu0
        %v1091 = vadd.f32 %v947, %v1090
        %v1092 = vpop.f32.mrf.mxu0
        %1093 = vmatprep.mubr.bf16.mxu0 0
        %1094 = vmatmul.mubr.bf16.gmra.mxu0 %v1010
        %v1095 = vpop.f32.mrf.mxu0
        %v1096 = vadd.f32 %v951, %v1095
        %v1097 = vpop.f32.mrf.mxu0
        %v1098 = vpop.f32.mrf.mxu0
        %v1099 = vadd.f32 %v955, %v1098
        %v1100 = vpop.f32.mrf.mxu0
        %1101 = vmatprep.mubr.bf16.mxu0 0
        %1102 = vmatmul.mubr.bf16.gmra.mxu0 %v1011
        %v1103 = vpop.f32.mrf.mxu0
        %v1104 = vadd.f32 %v959, %v1103
        %v1105 = vpop.f32.mrf.mxu0
        %v1106 = vpop.f32.mrf.mxu0
        %v1107 = vadd.f32 %v963, %v1106
        %v1108 = vpop.f32.mrf.mxu0
        %1109 = vmatprep.mubr.bf16.mxu0 0
        %1110 = vmatmul.mubr.bf16.gmra.mxu0 %v1012
        %v1111 = vpop.f32.mrf.mxu0
        %v1112 = vadd.f32 %v967, %v1111
        %v1113 = vpop.f32.mrf.mxu0
        %v1114 = vpop.f32.mrf.mxu0
        %v1115 = vadd.f32 %v971, %v1114
        %v1116 = vpop.f32.mrf.mxu0
        %1117 = vdwg.mxu0
        %v1118 = vmax.f32 %v1056, 0.0
        %v1119 = vmax.f32 %v1059, 0.0
        %v1120 = vmax.f32 %v1064, 0.0
        %v1121 = vmax.f32 %v1067, 0.0
        %v1122 = vmax.f32 %v1072, 0.0
        %v1123 = vmax.f32 %v1075, 0.0
        %v1124 = vmax.f32 %v1080, 0.0
        %v1125 = vmax.f32 %v1083, 0.0
        %v1126 = vmax.f32 %v1088, 0.0
        %v1127 = vmax.f32 %v1091, 0.0
        %v1128 = vmax.f32 %v1096, 0.0
        %v1129 = vmax.f32 %v1099, 0.0
        %v1130 = vmax.f32 %v1104, 0.0
        %v1131 = vmax.f32 %v1107, 0.0
        %v1132 = vmax.f32 %v1112, 0.0
        %v1133 = vmax.f32 %v1115, 0.0
        %s1134 = scalar_lea.vmem [#allocation2], 128
        %v1135 = vld [vmem:[%s1134] sm:$0xf]
        %v1136 = vld [vmem:[%s1134 + $0x4] sm:$0xf]
        %v1137 = vld [vmem:[%s1134 + $0x8] sm:$0xf]
        %v1138 = vld [vmem:[%s1134 + $0xc] sm:$0xf]
        %v1139 = vld [vmem:[%s1134 + $0x10] sm:$0xf]
        %v1140 = vld [vmem:[%s1134 + $0x14] sm:$0xf]
        %v1141 = vld [vmem:[%s1134 + $0x18] sm:$0xf]
        %v1142 = vld [vmem:[%s1134 + $0x1c] sm:$0xf]
        %v1143 = vld [vmem:[%s1134 + $0x20] sm:$0xf]
        %v1144 = vld [vmem:[%s1134 + $0x24] sm:$0xf]
        %v1145 = vld [vmem:[%s1134 + $0x28] sm:$0xf]
        %v1146 = vld [vmem:[%s1134 + $0x2c] sm:$0xf]
        %v1147 = vld [vmem:[%s1134 + $0x30] sm:$0xf]
        %v1148 = vld [vmem:[%s1134 + $0x34] sm:$0xf]
        %v1149 = vld [vmem:[%s1134 + $0x38] sm:$0xf]
        %v1150 = vld [vmem:[%s1134 + $0x3c] sm:$0xf]
        %v1151 = vpack.c.bf16 %v1119, %v1118
        %v1152 = vpack.c.bf16 %v1121, %v1120
        %v1153 = vpack.c.bf16 %v1123, %v1122
        %v1154 = vpack.c.bf16 %v1125, %v1124
        %v1155 = vpack.c.bf16 %v1127, %v1126
        %v1156 = vpack.c.bf16 %v1129, %v1128
        %v1157 = vpack.c.bf16 %v1131, %v1130
        %v1158 = vpack.c.bf16 %v1133, %v1132
        %v1175 = vunpack.c.l.b16 %v1135
        %v1176 = vunpack.c.l.b16 %v1136
        %v1177 = vunpack.c.l.b16 %v1137
        %v1178 = vunpack.c.l.b16 %v1138
        %v1179 = vunpack.c.l.b16 %v1139
        %v1180 = vunpack.c.l.b16 %v1140
        %v1181 = vunpack.c.l.b16 %v1141
        %v1182 = vunpack.c.l.b16 %v1142
        %v1183 = vunpack.c.l.b16 %v1143
        %v1184 = vunpack.c.l.b16 %v1144
        %v1185 = vunpack.c.l.b16 %v1145
        %v1186 = vunpack.c.l.b16 %v1146
        %v1187 = vunpack.c.l.b16 %v1147
        %v1188 = vunpack.c.l.b16 %v1148
        %v1189 = vunpack.c.l.b16 %v1149
        %v1190 = vunpack.c.l.b16 %v1150
        %v1191 = vpack.c.b16 %v1176, %v1175
        %v1192 = vpack.c.b16 %v1178, %v1177
        %v1193 = vpack.c.b16 %v1180, %v1179
        %v1194 = vpack.c.b16 %v1182, %v1181
        %v1195 = vpack.c.b16 %v1184, %v1183
        %v1196 = vpack.c.b16 %v1186, %v1185
        %v1197 = vpack.c.b16 %v1188, %v1187
        %v1198 = vpack.c.b16 %v1190, %v1189
        %1207 = vmatprep.subr.bf16.mxu0 0
        %1208 = vmatpush1.bf16.msra.mxu0 %v1158
        %1209 = vmatprep.subr.bf16.mxu0 0
        %1210 = vmatpush1.bf16.msra.mxu0 %v1157
        %1211 = vmatprep.subr.bf16.mxu0 0
        %1212 = vmatpush1.bf16.msra.mxu0 %v1156
        %1213 = vmatprep.subr.bf16.mxu0 0
        %1214 = vmatpush1.bf16.msra.mxu0 %v1155
        %1215 = vmatprep.subr.bf16.mxu0 0
        %1216 = vmatpush1.bf16.msra.mxu0 %v1154
        %1217 = vmatprep.subr.bf16.mxu0 0
        %1218 = vmatpush1.bf16.msra.mxu0 %v1153
        %1219 = vmatprep.subr.bf16.mxu0 0
        %1220 = vmatpush1.bf16.msra.mxu0 %v1152
        %1221 = vmatprep.subr.bf16.mxu0 0
        %1222 = vmatpush1.bf16.msra.mxu0 %v1151
        %1223 = vmatprep.subr.bf16.mxu0 0
        %1224 = vmatpush2.bf16.msra.mxu0 0
        %1225 = vmatprep.subr.bf16.mxu0 0
        %1226 = vmatpush2.bf16.msra.mxu0 0
        %1227 = vmatprep.subr.bf16.mxu0 0
        %1228 = vmatpush2.bf16.msra.mxu0 0
        %1229 = vmatprep.subr.bf16.mxu0 0
        %1230 = vmatpush2.bf16.msra.mxu0 0
        %1231 = vmatprep.subr.bf16.mxu0 0
        %1232 = vmatpush2.bf16.msra.mxu0 0
        %1233 = vmatprep.subr.bf16.mxu0 0
        %1234 = vmatpush2.bf16.msra.mxu0 0
        %1235 = vmatprep.subr.bf16.mxu0 0
        %1236 = vmatpush2.bf16.msra.mxu0 0
        %1237 = vmatprep.subr.bf16.mxu0 0
        %1238 = vmatpush2.bf16.msra.mxu0 0
        %1239 = vmatprep.mubr.bf16.mxu0 0
        %1240 = vmatmul.mubr.bf16.gmra.mxu0 %v1191
        %v1241 = vpop.f32.mrf.mxu0
        %v1242 = vadd.f32 0.0, %v1241
        %v1243 = vpop.f32.mrf.mxu0
        %v1244 = vpop.f32.mrf.mxu0
        %v1245 = vpop.f32.mrf.mxu0
        %1246 = vmatprep.mubr.bf16.mxu0 0
        %1247 = vmatmul.mubr.bf16.gmra.mxu0 %v1192
        %v1248 = vpop.f32.mrf.mxu0
        %v1249 = vpop.f32.mrf.mxu0
        %v1250 = vpop.f32.mrf.mxu0
        %v1251 = vpop.f32.mrf.mxu0
        %1252 = vmatprep.mubr.bf16.mxu0 0
        %1253 = vmatmul.mubr.bf16.gmra.mxu0 %v1193
        %v1254 = vpop.f32.mrf.mxu0
        %v1255 = vpop.f32.mrf.mxu0
        %v1256 = vpop.f32.mrf.mxu0
        %v1257 = vpop.f32.mrf.mxu0
        %1258 = vmatprep.mubr.bf16.mxu0 0
        %1259 = vmatmul.mubr.bf16.gmra.mxu0 %v1194
        %v1260 = vpop.f32.mrf.mxu0
        %v1261 = vpop.f32.mrf.mxu0
        %v1262 = vpop.f32.mrf.mxu0
        %v1263 = vpop.f32.mrf.mxu0
        %1264 = vmatprep.mubr.bf16.mxu0 0
        %1265 = vmatmul.mubr.bf16.gmra.mxu0 %v1195
        %v1266 = vpop.f32.mrf.mxu0
        %v1267 = vpop.f32.mrf.mxu0
        %v1268 = vpop.f32.mrf.mxu0
        %v1269 = vpop.f32.mrf.mxu0
        %1270 = vmatprep.mubr.bf16.mxu0 0
        %1271 = vmatmul.mubr.bf16.gmra.mxu0 %v1196
        %v1272 = vpop.f32.mrf.mxu0
        %v1273 = vpop.f32.mrf.mxu0
        %v1274 = vpop.f32.mrf.mxu0
        %v1275 = vpop.f32.mrf.mxu0
        %1276 = vmatprep.mubr.bf16.mxu0 0
        %1277 = vmatmul.mubr.bf16.gmra.mxu0 %v1197
        %v1278 = vpop.f32.mrf.mxu0
        %v1279 = vpop.f32.mrf.mxu0
        %v1280 = vpop.f32.mrf.mxu0
        %v1281 = vpop.f32.mrf.mxu0
        %1282 = vmatprep.mubr.bf16.mxu0 0
        %1283 = vmatmul.mubr.bf16.gmra.mxu0 %v1198
        %v1284 = vpop.f32.mrf.mxu0
        %v1285 = vpop.f32.mrf.mxu0
        %v1286 = vpop.f32.mrf.mxu0
        %v1287 = vpop.f32.mrf.mxu0
        %1288 = vdwg.mxu0
        %v1289 = vld [vmem:[%s4] sm:$0x1]
        %1291 = vset.pattern.permute.xlu0 3
        %1292 = vperm.xlu0 %1291, %v1289
        %v1293 = vpop.permute.xlu0 %1292
        %v1295 = vadd.f32 %v1242, %v1293
        %v1296 = vxor.u32 %v1295, 2147483648
        %v1297 = vmul.f32 %v1296, 1.442695
        %v1298 = vpow.pop %v1297
        %v1299 = vadd.f32 %v1298, 1.0
        %v1300 = vrcp.pop %v1299
        %v1301 = vmul.f32 1.0, %v1300
        %vm1302 = vcmask 57344
        %1303 = vst.msk [vmem:[%s238] sm:$0x1] %vm1302, %v1301
        %s1304 = sand.u32 %s143, 1
        %s1305 = scalar_lea.sflag [#allocation4], %s1304
        %s1306 = sand.u32 %s143, 1
        %s1307 = scalar_lea.vmem [#allocation5], %s1306
        // Predicated region
        $region45: #{tpu_custom_call.1} parent=39 // pred_check
          %p1308 = pneg %p153
        $region46: #{tpu_custom_call.1} parent=39 // pred_check_branch
          %1310 = sbr.rel (%p1308) target = $region48
        $region47: #{tpu_custom_call.1} parent=39 // pred_region
          %s1312 = ssub.s32 16, 16
          %1313 = vsyncadd %s1305, %s1312
          %s1314 = smul.addr %s20, 16
          %s1315 = scalar_lea.hbm %s5, %s1314
          %s1317 = sshll.u32 %s1307, 4
          %s1318 = int_to_ptr.vmem [resolvable:$true] %s1317
          %1320 = dma.vmem_to_hbm [thread:$0]  %s1318, 16, %s1315, %s1305
        $region48: #{tpu_custom_call.1} parent=39 // pred_fallthru
          _
      $region40: #{tpu_custom_call.1} parent=5 // pred_fallthru
        _
      %p1321 = scmp.le.s32.totalorder 2, %s15
      // Predicated region
      $region49: #{tpu_custom_call.1} parent=5 // pred_check
        %p1322 = pneg %p1321
      $region50: #{tpu_custom_call.1} parent=5 // pred_check_branch
        %1324 = sbr.rel (%p1322) target = $region52
      $region51: #{tpu_custom_call.1} parent=5 // pred_region
        %s1325 = ssub.s32 %s15, 2
        // Predicated region
        $region53: #{tpu_custom_call.1} parent=51 // pred_check
          %p1326 = pneg %p159
        $region54: #{tpu_custom_call.1} parent=51 // pred_check_branch
          %1328 = sbr.rel (%p1326) target = $region56
        $region55: #{tpu_custom_call.1} parent=51 // pred_region
          %s1329 = sand.u32 %s144, 1
          %s1330 = scalar_lea.sflag [#allocation4], %s1329
          %s1331 = sand.u32 %s144, 1
          %s1332 = scalar_lea.vmem [#allocation5], %s1331
          %1333 = dma.done %s1330, 16
        $region56: #{tpu_custom_call.1} parent=51 // pred_fallthru
          _
      $region52: #{tpu_custom_call.1} parent=5 // pred_fallthru
        _
    $region6: #{tpu_custom_call.1} parent=1 // loop_footer
      %s19 = sadd.s32 1, %s15
    $region7: #{tpu_custom_call.1} parent=1 // loop_footer_branch
      %14 = sbr.rel target = $region3
    $region8: #{tpu_custom_call.1} parent=1 // loop_exit
      _
    %1334 = vsyncpa [#allocation3], 1
    %s1335 = scalar_lea.sflag [#allocation3], 1
    %1336 = vsyncpa %s1335, 1
    %1337 = vsyncpa [#allocation4], 1
    %s1338 = scalar_lea.sflag [#allocation4], 1
    %1339 = vsyncpa %s1338, 1

</llo_original>
